<compile_context>
chip_gen: v6e
topology: v6e:2x2x1
jax: 0.10.0
libtpu: 0.0.40
codegen_flags: <defaults>
</compile_context>

<pallas_src>
import jax
import jax.numpy as jnp
from jax.experimental import pallas as pl
from jax.experimental.pallas import tpu as pltpu


def lstm_classifier_kernel(x_ref, len_ref, h0_ref, c0_ref,
                           wih_ref, whh_ref, b_ref, wo_ref, bo_ref,
                           out_ref):
    TB, D = x_ref.shape            # (T*B, D) bf16
    B, H = h0_ref.shape            # (B, H)   f32
    T = TB // B

    # ---- Prologue (off the serial per-step chain) ---------------------------
    # One (T*B, D) @ (D, 4H) MXU matmul in bf16, f32 accumulation, kept as a
    # register-resident value (8 vregs at T=8, B=8, 4H=128).
    xp = jnp.dot(x_ref[...], wih_ref[...],
                 preferred_element_type=jnp.float32) + b_ref[...]     # (T*B, 4H) f32

    # Recurrent weight stays f32 (tiny: H x 4H = 16 KiB) and resident across steps.
    whh = whh_ref[...]                                                # (H, 4H) f32

    # Packed-sequence keep mask, precomputed once: keep[t, b, :] = t < length[b].
    lens = len_ref[...]                                               # (B, 1) int32
    t_iota = jax.lax.broadcasted_iota(jnp.int32, (T, B, H), 0)
    keep_all = t_iota < lens[None, :, :]                              # (T, B, H) bool

    h = h0_ref[...]                                                   # (B, H) f32
    c = c0_ref[...]                                                   # (B, H) f32

    # ---- Fully unrolled recurrence; only h @ W_hh stays on the serial chain.
    for t in range(T):
        x_t = xp[t * B:(t + 1) * B, :]                                # static sublane slice
        gates = x_t + jnp.dot(h, whh, preferred_element_type=jnp.float32)
        # Two full-vreg EUP passes; gates picked out with static lane slices.
        sig = jax.nn.sigmoid(gates)
        tnh = jnp.tanh(gates)
        i_g = sig[:, 0 * H:1 * H]
        f_g = sig[:, 1 * H:2 * H]
        g_g = tnh[:, 2 * H:3 * H]
        o_g = sig[:, 3 * H:4 * H]
        c_new = f_g * c + i_g * g_g
        h_new = o_g * jnp.tanh(c_new)
        keep = keep_all[t]                                            # (B, H) bool, static index
        h = jnp.where(keep, h_new, h)
        c = jnp.where(keep, c_new, c)

    # Dropout(p=0.2) is identity in eval; then Linear + LogSoftmax(dim=1).
    logits = (jnp.dot(h, wo_ref[...], preferred_element_type=jnp.float32)
              + bo_ref[...])
    out_ref[...] = jax.nn.log_softmax(logits, axis=1)


def lstm_classifier_forward(embeds, lengths, h0, c0,
                            w_ih, w_hh, b_lstm, w_out, b_out):
    """embeds: (T, B, D) f32, lengths: (B,) int32 (all >= 1) -> (B, O) log-probs."""
    T, B, D = embeds.shape
    O = b_out.shape[1]
    x2d = embeds.reshape(T * B, D).astype(jnp.bfloat16)
    lengths2d = lengths.reshape(B, 1).astype(jnp.int32)

    vmem_specs = [pl.BlockSpec(memory_space=pltpu.MemorySpace.VMEM)
                  for _ in range(9)]

    return pl.pallas_call(
        lstm_classifier_kernel,
        out_shape=jax.ShapeDtypeStruct((B, O), jnp.float32),
        in_specs=vmem_specs,
        out_specs=pl.BlockSpec(memory_space=pltpu.MemorySpace.VMEM),
    )(x2d, lengths2d, h0, c0,
      w_ih.astype(jnp.bfloat16),            # bf16 only for the hoisted projection
      w_hh.astype(jnp.float32),             # recurrence stays f32
      b_lstm, w_out, b_out)


def reference_forward(embeds, lengths, h0, c0, w_ih, w_hh, b_lstm, w_out, b_out):
    """Plain-JAX f32 reference of the same forward pass."""
    T, B, D = embeds.shape
    H = h0.shape[1]
    h, c = h0, c0
    for t in range(T):
        gates = embeds[t] @ w_ih + h @ w_hh + b_lstm
        i_g = jax.nn.sigmoid(gates[:, 0 * H:1 * H])
        f_g = jax.nn.sigmoid(gates[:, 1 * H:2 * H])
        g_g = jnp.tanh(gates[:, 2 * H:3 * H])
        o_g = jax.nn.sigmoid(gates[:, 3 * H:4 * H])
        c_new = f_g * c + i_g * g_g
        h_new = o_g * jnp.tanh(c_new)
        keep = (t < lengths)[:, None]
        h = jnp.where(keep, h_new, h)
        c = jnp.where(keep, c_new, c)
    logits = h @ w_out + b_out
    return jax.nn.log_softmax(logits, axis=1)


if __name__ == "__main__":
    # Module hyper-parameters (small, consistent with the forward pass).
    vocab_size, input_dim, hidden_dim, output_size = 50, 16, 32, 8
    T, B = 8, 8  # seq_len, batch_size

    key = jax.random.PRNGKey(0)
    ks = jax.random.split(key, 10)

    # Deterministic parameter init (shapes mirror nn.Embedding / nn.LSTM / nn.Linear).
    emb_table = jax.random.normal(ks[0], (vocab_size, input_dim), jnp.float32) * 0.1
    # PyTorch LSTM weights are (4H, D) / (4H, H); stored transposed for x @ W.
    w_ih = jax.random.normal(ks[1], (input_dim, 4 * hidden_dim), jnp.float32) * 0.1
    w_hh = jax.random.normal(ks[2], (hidden_dim, 4 * hidden_dim), jnp.float32) * 0.1
    b_lstm = (jax.random.normal(ks[3], (1, 4 * hidden_dim), jnp.float32) * 0.1
              + jax.random.normal(ks[4], (1, 4 * hidden_dim), jnp.float32) * 0.1)
    w_out = jax.random.normal(ks[5], (hidden_dim, output_size), jnp.float32) * 0.1
    b_out = jax.random.normal(ks[6], (1, output_size), jnp.float32) * 0.1

    # forward(): self.hidden = init_hidden(batch_size) -> randn initial state.
    h0 = jax.random.normal(ks[7], (B, hidden_dim), jnp.float32)
    c0 = jax.random.normal(ks[8], (B, hidden_dim), jnp.float32)

    # Inputs: token ids (T, B) and descending lengths >= 1 (pack_padded_sequence).
    tokens = jax.random.randint(ks[9], (T, B), 0, vocab_size, jnp.int32)
    lengths = jnp.sort(
        jax.random.randint(jax.random.PRNGKey(1), (B,), 1, T + 1, jnp.int32)
    )[::-1]

    # Glue: embedding lookup in plain JAX.
    embeds = jnp.take(emb_table, tokens, axis=0)   # (T, B, D)

    out = lstm_classifier_forward(embeds, lengths, h0, c0,
                                  w_ih, w_hh, b_lstm, w_out, b_out)
    out = jax.block_until_ready(out)

    ref = reference_forward(embeds, lengths, h0, c0,
                            w_ih, w_hh, b_lstm, w_out, b_out)
    ref = jax.block_until_ready(ref)

    assert out.shape == (B, output_size)
    assert bool(jnp.all(jnp.isfinite(out)))
    # Only the hoisted X @ W_ih matmul is bf16 (f32 accumulation); recurrence is f32.
    assert bool(jnp.allclose(out, ref, atol=3e-2, rtol=3e-2))
    print("KERNEL_OK")
</pallas_src>

<mosaic_0001>
module attributes {stable_mosaic.version = 11 : i64} {
  func.func @lstm_classifier_kernel(%arg0: memref<64x16xbf16, #tpu.memory_space<vmem>>, %arg1: memref<8x1xi32, #tpu.memory_space<vmem>>, %arg2: memref<8x32xf32, #tpu.memory_space<vmem>>, %arg3: memref<8x32xf32, #tpu.memory_space<vmem>>, %arg4: memref<16x128xbf16, #tpu.memory_space<vmem>>, %arg5: memref<32x128xf32, #tpu.memory_space<vmem>>, %arg6: memref<1x128xf32, #tpu.memory_space<vmem>>, %arg7: memref<32x8xf32, #tpu.memory_space<vmem>>, %arg8: memref<1x8xf32, #tpu.memory_space<vmem>>, %arg9: memref<8x8xf32, #tpu.memory_space<vmem>>) attributes {dimension_semantics = [], scalar_prefetch = 0 : i64, scratch_operands = 0 : i64, tpu.core_type = #tpu.core_type<tc>} {
    %c0 = arith.constant 0 : index
    %c0_0 = arith.constant 0 : index
    %0 = vector.load %arg0[%c0, %c0_0] : memref<64x16xbf16, #tpu.memory_space<vmem>>, vector<64x16xbf16>
    %c0_1 = arith.constant 0 : index
    %c0_2 = arith.constant 0 : index
    %1 = vector.load %arg4[%c0_1, %c0_2] : memref<16x128xbf16, #tpu.memory_space<vmem>>, vector<16x128xbf16>
    %cst = arith.constant dense<0.000000e+00> : vector<64x128xf32>
    %2 = tpu.matmul %0, %1, %cst {dimension_numbers = #tpu.dot_dimension_numbers<[1], [0], [0], [1], [0, 0, 1, 1], [], []>} : vector<64x16xbf16>, vector<16x128xbf16>, vector<64x128xf32> -> vector<64x128xf32>
    %c0_3 = arith.constant 0 : index
    %c0_4 = arith.constant 0 : index
    %3 = vector.load %arg6[%c0_3, %c0_4] : memref<1x128xf32, #tpu.memory_space<vmem>>, vector<1x128xf32>
    %4 = vector.broadcast %3 : vector<1x128xf32> to vector<64x128xf32>
    %5 = arith.addf %2, %4 : vector<64x128xf32>
    %c0_5 = arith.constant 0 : index
    %c0_6 = arith.constant 0 : index
    %6 = vector.load %arg5[%c0_5, %c0_6] : memref<32x128xf32, #tpu.memory_space<vmem>>, vector<32x128xf32>
    %c0_7 = arith.constant 0 : index
    %c0_8 = arith.constant 0 : index
    %7 = vector.load %arg1[%c0_7, %c0_8] : memref<8x1xi32, #tpu.memory_space<vmem>>, vector<8x1xi32>
    %8 = tpu.iota {dimensions = array<i32: 0>} : vector<8x8x32xi32>
    %9 = vector.shape_cast %7 : vector<8x1xi32> to vector<1x8x1xi32>
    %10 = vector.broadcast %9 : vector<1x8x1xi32> to vector<8x8x32xi32>
    %11 = arith.cmpi slt, %8, %10 : vector<8x8x32xi32>
    %c0_9 = arith.constant 0 : index
    %c0_10 = arith.constant 0 : index
    %12 = vector.load %arg2[%c0_9, %c0_10] : memref<8x32xf32, #tpu.memory_space<vmem>>, vector<8x32xf32>
    %c0_11 = arith.constant 0 : index
    %c0_12 = arith.constant 0 : index
    %13 = vector.load %arg3[%c0_11, %c0_12] : memref<8x32xf32, #tpu.memory_space<vmem>>, vector<8x32xf32>
    %14 = vector.extract_strided_slice %5 {offsets = [0, 0], sizes = [8, 128], strides = [1, 1]} : vector<64x128xf32> to vector<8x128xf32>
    %cst_13 = arith.constant dense<0.000000e+00> : vector<8x128xf32>
    %15 = tpu.matmul %12, %6, %cst_13 {dimension_numbers = #tpu.dot_dimension_numbers<[1], [0], [0], [1], [0, 0, 1, 1], [], []>} : vector<8x32xf32>, vector<32x128xf32>, vector<8x128xf32> -> vector<8x128xf32>
    %16 = arith.addf %14, %15 : vector<8x128xf32>
    %17 = arith.negf %16 : vector<8x128xf32>
    %18 = math.exp %17 : vector<8x128xf32>
    %cst_14 = arith.constant 1.000000e+00 : f32
    %19 = vector.broadcast %cst_14 : f32 to vector<8x128xf32>
    %20 = arith.addf %19, %18 : vector<8x128xf32>
    %21 = arith.divf %19, %20 : vector<8x128xf32>
    %22 = math.tanh %16 : vector<8x128xf32>
    %23 = vector.extract_strided_slice %21 {offsets = [0, 0], sizes = [8, 32], strides = [1, 1]} : vector<8x128xf32> to vector<8x32xf32>
    %24 = vector.extract_strided_slice %21 {offsets = [0, 32], sizes = [8, 32], strides = [1, 1]} : vector<8x128xf32> to vector<8x32xf32>
    %25 = vector.extract_strided_slice %22 {offsets = [0, 64], sizes = [8, 32], strides = [1, 1]} : vector<8x128xf32> to vector<8x32xf32>
    %26 = vector.extract_strided_slice %21 {offsets = [0, 96], sizes = [8, 32], strides = [1, 1]} : vector<8x128xf32> to vector<8x32xf32>
    %27 = arith.mulf %24, %13 : vector<8x32xf32>
    %28 = arith.mulf %23, %25 : vector<8x32xf32>
    %29 = arith.addf %27, %28 : vector<8x32xf32>
    %30 = math.tanh %29 : vector<8x32xf32>
    %31 = arith.mulf %26, %30 : vector<8x32xf32>
    %32 = vector.extract_strided_slice %11 {offsets = [0, 0, 0], sizes = [1, 8, 32], strides = [1, 1, 1]} : vector<8x8x32xi1> to vector<1x8x32xi1>
    %33 = vector.shape_cast %32 : vector<1x8x32xi1> to vector<8x32xi1>
    %34 = arith.select %33, %31, %12 : vector<8x32xi1>, vector<8x32xf32>
    %35 = arith.select %33, %29, %13 : vector<8x32xi1>, vector<8x32xf32>
    %36 = vector.extract_strided_slice %5 {offsets = [8, 0], sizes = [8, 128], strides = [1, 1]} : vector<64x128xf32> to vector<8x128xf32>
    %cst_15 = arith.constant dense<0.000000e+00> : vector<8x128xf32>
    %37 = tpu.matmul %34, %6, %cst_15 {dimension_numbers = #tpu.dot_dimension_numbers<[1], [0], [0], [1], [0, 0, 1, 1], [], []>} : vector<8x32xf32>, vector<32x128xf32>, vector<8x128xf32> -> vector<8x128xf32>
    %38 = arith.addf %36, %37 : vector<8x128xf32>
    %39 = arith.negf %38 : vector<8x128xf32>
    %40 = math.exp %39 : vector<8x128xf32>
    %cst_16 = arith.constant 1.000000e+00 : f32
    %41 = vector.broadcast %cst_16 : f32 to vector<8x128xf32>
    %42 = arith.addf %41, %40 : vector<8x128xf32>
    %43 = arith.divf %41, %42 : vector<8x128xf32>
    %44 = math.tanh %38 : vector<8x128xf32>
    %45 = vector.extract_strided_slice %43 {offsets = [0, 0], sizes = [8, 32], strides = [1, 1]} : vector<8x128xf32> to vector<8x32xf32>
    %46 = vector.extract_strided_slice %43 {offsets = [0, 32], sizes = [8, 32], strides = [1, 1]} : vector<8x128xf32> to vector<8x32xf32>
    %47 = vector.extract_strided_slice %44 {offsets = [0, 64], sizes = [8, 32], strides = [1, 1]} : vector<8x128xf32> to vector<8x32xf32>
    %48 = vector.extract_strided_slice %43 {offsets = [0, 96], sizes = [8, 32], strides = [1, 1]} : vector<8x128xf32> to vector<8x32xf32>
    %49 = arith.mulf %46, %35 : vector<8x32xf32>
    %50 = arith.mulf %45, %47 : vector<8x32xf32>
    %51 = arith.addf %49, %50 : vector<8x32xf32>
    %52 = math.tanh %51 : vector<8x32xf32>
    %53 = arith.mulf %48, %52 : vector<8x32xf32>
    %54 = vector.extract_strided_slice %11 {offsets = [1, 0, 0], sizes = [1, 8, 32], strides = [1, 1, 1]} : vector<8x8x32xi1> to vector<1x8x32xi1>
    %55 = vector.shape_cast %54 : vector<1x8x32xi1> to vector<8x32xi1>
    %56 = arith.select %55, %53, %34 : vector<8x32xi1>, vector<8x32xf32>
    %57 = arith.select %55, %51, %35 : vector<8x32xi1>, vector<8x32xf32>
    %58 = vector.extract_strided_slice %5 {offsets = [16, 0], sizes = [8, 128], strides = [1, 1]} : vector<64x128xf32> to vector<8x128xf32>
    %cst_17 = arith.constant dense<0.000000e+00> : vector<8x128xf32>
    %59 = tpu.matmul %56, %6, %cst_17 {dimension_numbers = #tpu.dot_dimension_numbers<[1], [0], [0], [1], [0, 0, 1, 1], [], []>} : vector<8x32xf32>, vector<32x128xf32>, vector<8x128xf32> -> vector<8x128xf32>
    %60 = arith.addf %58, %59 : vector<8x128xf32>
    %61 = arith.negf %60 : vector<8x128xf32>
    %62 = math.exp %61 : vector<8x128xf32>
    %cst_18 = arith.constant 1.000000e+00 : f32
    %63 = vector.broadcast %cst_18 : f32 to vector<8x128xf32>
    %64 = arith.addf %63, %62 : vector<8x128xf32>
    %65 = arith.divf %63, %64 : vector<8x128xf32>
    %66 = math.tanh %60 : vector<8x128xf32>
    %67 = vector.extract_strided_slice %65 {offsets = [0, 0], sizes = [8, 32], strides = [1, 1]} : vector<8x128xf32> to vector<8x32xf32>
    %68 = vector.extract_strided_slice %65 {offsets = [0, 32], sizes = [8, 32], strides = [1, 1]} : vector<8x128xf32> to vector<8x32xf32>
    %69 = vector.extract_strided_slice %66 {offsets = [0, 64], sizes = [8, 32], strides = [1, 1]} : vector<8x128xf32> to vector<8x32xf32>
    %70 = vector.extract_strided_slice %65 {offsets = [0, 96], sizes = [8, 32], strides = [1, 1]} : vector<8x128xf32> to vector<8x32xf32>
    %71 = arith.mulf %68, %57 : vector<8x32xf32>
    %72 = arith.mulf %67, %69 : vector<8x32xf32>
    %73 = arith.addf %71, %72 : vector<8x32xf32>
    %74 = math.tanh %73 : vector<8x32xf32>
    %75 = arith.mulf %70, %74 : vector<8x32xf32>
    %76 = vector.extract_strided_slice %11 {offsets = [2, 0, 0], sizes = [1, 8, 32], strides = [1, 1, 1]} : vector<8x8x32xi1> to vector<1x8x32xi1>
    %77 = vector.shape_cast %76 : vector<1x8x32xi1> to vector<8x32xi1>
    %78 = arith.select %77, %75, %56 : vector<8x32xi1>, vector<8x32xf32>
    %79 = arith.select %77, %73, %57 : vector<8x32xi1>, vector<8x32xf32>
    %80 = vector.extract_strided_slice %5 {offsets = [24, 0], sizes = [8, 128], strides = [1, 1]} : vector<64x128xf32> to vector<8x128xf32>
    %cst_19 = arith.constant dense<0.000000e+00> : vector<8x128xf32>
    %81 = tpu.matmul %78, %6, %cst_19 {dimension_numbers = #tpu.dot_dimension_numbers<[1], [0], [0], [1], [0, 0, 1, 1], [], []>} : vector<8x32xf32>, vector<32x128xf32>, vector<8x128xf32> -> vector<8x128xf32>
    %82 = arith.addf %80, %81 : vector<8x128xf32>
    %83 = arith.negf %82 : vector<8x128xf32>
    %84 = math.exp %83 : vector<8x128xf32>
    %cst_20 = arith.constant 1.000000e+00 : f32
    %85 = vector.broadcast %cst_20 : f32 to vector<8x128xf32>
    %86 = arith.addf %85, %84 : vector<8x128xf32>
    %87 = arith.divf %85, %86 : vector<8x128xf32>
    %88 = math.tanh %82 : vector<8x128xf32>
    %89 = vector.extract_strided_slice %87 {offsets = [0, 0], sizes = [8, 32], strides = [1, 1]} : vector<8x128xf32> to vector<8x32xf32>
    %90 = vector.extract_strided_slice %87 {offsets = [0, 32], sizes = [8, 32], strides = [1, 1]} : vector<8x128xf32> to vector<8x32xf32>
    %91 = vector.extract_strided_slice %88 {offsets = [0, 64], sizes = [8, 32], strides = [1, 1]} : vector<8x128xf32> to vector<8x32xf32>
    %92 = vector.extract_strided_slice %87 {offsets = [0, 96], sizes = [8, 32], strides = [1, 1]} : vector<8x128xf32> to vector<8x32xf32>
    %93 = arith.mulf %90, %79 : vector<8x32xf32>
    %94 = arith.mulf %89, %91 : vector<8x32xf32>
    %95 = arith.addf %93, %94 : vector<8x32xf32>
    %96 = math.tanh %95 : vector<8x32xf32>
    %97 = arith.mulf %92, %96 : vector<8x32xf32>
    %98 = vector.extract_strided_slice %11 {offsets = [3, 0, 0], sizes = [1, 8, 32], strides = [1, 1, 1]} : vector<8x8x32xi1> to vector<1x8x32xi1>
    %99 = vector.shape_cast %98 : vector<1x8x32xi1> to vector<8x32xi1>
    %100 = arith.select %99, %97, %78 : vector<8x32xi1>, vector<8x32xf32>
    %101 = arith.select %99, %95, %79 : vector<8x32xi1>, vector<8x32xf32>
    %102 = vector.extract_strided_slice %5 {offsets = [32, 0], sizes = [8, 128], strides = [1, 1]} : vector<64x128xf32> to vector<8x128xf32>
    %cst_21 = arith.constant dense<0.000000e+00> : vector<8x128xf32>
    %103 = tpu.matmul %100, %6, %cst_21 {dimension_numbers = #tpu.dot_dimension_numbers<[1], [0], [0], [1], [0, 0, 1, 1], [], []>} : vector<8x32xf32>, vector<32x128xf32>, vector<8x128xf32> -> vector<8x128xf32>
    %104 = arith.addf %102, %103 : vector<8x128xf32>
    %105 = arith.negf %104 : vector<8x128xf32>
    %106 = math.exp %105 : vector<8x128xf32>
    %cst_22 = arith.constant 1.000000e+00 : f32
    %107 = vector.broadcast %cst_22 : f32 to vector<8x128xf32>
    %108 = arith.addf %107, %106 : vector<8x128xf32>
    %109 = arith.divf %107, %108 : vector<8x128xf32>
    %110 = math.tanh %104 : vector<8x128xf32>
    %111 = vector.extract_strided_slice %109 {offsets = [0, 0], sizes = [8, 32], strides = [1, 1]} : vector<8x128xf32> to vector<8x32xf32>
    %112 = vector.extract_strided_slice %109 {offsets = [0, 32], sizes = [8, 32], strides = [1, 1]} : vector<8x128xf32> to vector<8x32xf32>
    %113 = vector.extract_strided_slice %110 {offsets = [0, 64], sizes = [8, 32], strides = [1, 1]} : vector<8x128xf32> to vector<8x32xf32>
    %114 = vector.extract_strided_slice %109 {offsets = [0, 96], sizes = [8, 32], strides = [1, 1]} : vector<8x128xf32> to vector<8x32xf32>
    %115 = arith.mulf %112, %101 : vector<8x32xf32>
    %116 = arith.mulf %111, %113 : vector<8x32xf32>
    %117 = arith.addf %115, %116 : vector<8x32xf32>
    %118 = math.tanh %117 : vector<8x32xf32>
    %119 = arith.mulf %114, %118 : vector<8x32xf32>
    %120 = vector.extract_strided_slice %11 {offsets = [4, 0, 0], sizes = [1, 8, 32], strides = [1, 1, 1]} : vector<8x8x32xi1> to vector<1x8x32xi1>
    %121 = vector.shape_cast %120 : vector<1x8x32xi1> to vector<8x32xi1>
    %122 = arith.select %121, %119, %100 : vector<8x32xi1>, vector<8x32xf32>
    %123 = arith.select %121, %117, %101 : vector<8x32xi1>, vector<8x32xf32>
    %124 = vector.extract_strided_slice %5 {offsets = [40, 0], sizes = [8, 128], strides = [1, 1]} : vector<64x128xf32> to vector<8x128xf32>
    %cst_23 = arith.constant dense<0.000000e+00> : vector<8x128xf32>
    %125 = tpu.matmul %122, %6, %cst_23 {dimension_numbers = #tpu.dot_dimension_numbers<[1], [0], [0], [1], [0, 0, 1, 1], [], []>} : vector<8x32xf32>, vector<32x128xf32>, vector<8x128xf32> -> vector<8x128xf32>
    %126 = arith.addf %124, %125 : vector<8x128xf32>
    %127 = arith.negf %126 : vector<8x128xf32>
    %128 = math.exp %127 : vector<8x128xf32>
    %cst_24 = arith.constant 1.000000e+00 : f32
    %129 = vector.broadcast %cst_24 : f32 to vector<8x128xf32>
    %130 = arith.addf %129, %128 : vector<8x128xf32>
    %131 = arith.divf %129, %130 : vector<8x128xf32>
    %132 = math.tanh %126 : vector<8x128xf32>
    %133 = vector.extract_strided_slice %131 {offsets = [0, 0], sizes = [8, 32], strides = [1, 1]} : vector<8x128xf32> to vector<8x32xf32>
    %134 = vector.extract_strided_slice %131 {offsets = [0, 32], sizes = [8, 32], strides = [1, 1]} : vector<8x128xf32> to vector<8x32xf32>
    %135 = vector.extract_strided_slice %132 {offsets = [0, 64], sizes = [8, 32], strides = [1, 1]} : vector<8x128xf32> to vector<8x32xf32>
    %136 = vector.extract_strided_slice %131 {offsets = [0, 96], sizes = [8, 32], strides = [1, 1]} : vector<8x128xf32> to vector<8x32xf32>
    %137 = arith.mulf %134, %123 : vector<8x32xf32>
    %138 = arith.mulf %133, %135 : vector<8x32xf32>
    %139 = arith.addf %137, %138 : vector<8x32xf32>
    %140 = math.tanh %139 : vector<8x32xf32>
    %141 = arith.mulf %136, %140 : vector<8x32xf32>
    %142 = vector.extract_strided_slice %11 {offsets = [5, 0, 0], sizes = [1, 8, 32], strides = [1, 1, 1]} : vector<8x8x32xi1> to vector<1x8x32xi1>
    %143 = vector.shape_cast %142 : vector<1x8x32xi1> to vector<8x32xi1>
    %144 = arith.select %143, %141, %122 : vector<8x32xi1>, vector<8x32xf32>
    %145 = arith.select %143, %139, %123 : vector<8x32xi1>, vector<8x32xf32>
    %146 = vector.extract_strided_slice %5 {offsets = [48, 0], sizes = [8, 128], strides = [1, 1]} : vector<64x128xf32> to vector<8x128xf32>
    %cst_25 = arith.constant dense<0.000000e+00> : vector<8x128xf32>
    %147 = tpu.matmul %144, %6, %cst_25 {dimension_numbers = #tpu.dot_dimension_numbers<[1], [0], [0], [1], [0, 0, 1, 1], [], []>} : vector<8x32xf32>, vector<32x128xf32>, vector<8x128xf32> -> vector<8x128xf32>
    %148 = arith.addf %146, %147 : vector<8x128xf32>
    %149 = arith.negf %148 : vector<8x128xf32>
    %150 = math.exp %149 : vector<8x128xf32>
    %cst_26 = arith.constant 1.000000e+00 : f32
    %151 = vector.broadcast %cst_26 : f32 to vector<8x128xf32>
    %152 = arith.addf %151, %150 : vector<8x128xf32>
    %153 = arith.divf %151, %152 : vector<8x128xf32>
    %154 = math.tanh %148 : vector<8x128xf32>
    %155 = vector.extract_strided_slice %153 {offsets = [0, 0], sizes = [8, 32], strides = [1, 1]} : vector<8x128xf32> to vector<8x32xf32>
    %156 = vector.extract_strided_slice %153 {offsets = [0, 32], sizes = [8, 32], strides = [1, 1]} : vector<8x128xf32> to vector<8x32xf32>
    %157 = vector.extract_strided_slice %154 {offsets = [0, 64], sizes = [8, 32], strides = [1, 1]} : vector<8x128xf32> to vector<8x32xf32>
    %158 = vector.extract_strided_slice %153 {offsets = [0, 96], sizes = [8, 32], strides = [1, 1]} : vector<8x128xf32> to vector<8x32xf32>
    %159 = arith.mulf %156, %145 : vector<8x32xf32>
    %160 = arith.mulf %155, %157 : vector<8x32xf32>
    %161 = arith.addf %159, %160 : vector<8x32xf32>
    %162 = math.tanh %161 : vector<8x32xf32>
    %163 = arith.mulf %158, %162 : vector<8x32xf32>
    %164 = vector.extract_strided_slice %11 {offsets = [6, 0, 0], sizes = [1, 8, 32], strides = [1, 1, 1]} : vector<8x8x32xi1> to vector<1x8x32xi1>
    %165 = vector.shape_cast %164 : vector<1x8x32xi1> to vector<8x32xi1>
    %166 = arith.select %165, %163, %144 : vector<8x32xi1>, vector<8x32xf32>
    %167 = arith.select %165, %161, %145 : vector<8x32xi1>, vector<8x32xf32>
    %168 = vector.extract_strided_slice %5 {offsets = [56, 0], sizes = [8, 128], strides = [1, 1]} : vector<64x128xf32> to vector<8x128xf32>
    %cst_27 = arith.constant dense<0.000000e+00> : vector<8x128xf32>
    %169 = tpu.matmul %166, %6, %cst_27 {dimension_numbers = #tpu.dot_dimension_numbers<[1], [0], [0], [1], [0, 0, 1, 1], [], []>} : vector<8x32xf32>, vector<32x128xf32>, vector<8x128xf32> -> vector<8x128xf32>
    %170 = arith.addf %168, %169 : vector<8x128xf32>
    %171 = arith.negf %170 : vector<8x128xf32>
    %172 = math.exp %171 : vector<8x128xf32>
    %cst_28 = arith.constant 1.000000e+00 : f32
    %173 = vector.broadcast %cst_28 : f32 to vector<8x128xf32>
    %174 = arith.addf %173, %172 : vector<8x128xf32>
    %175 = arith.divf %173, %174 : vector<8x128xf32>
    %176 = math.tanh %170 : vector<8x128xf32>
    %177 = vector.extract_strided_slice %175 {offsets = [0, 0], sizes = [8, 32], strides = [1, 1]} : vector<8x128xf32> to vector<8x32xf32>
    %178 = vector.extract_strided_slice %175 {offsets = [0, 32], sizes = [8, 32], strides = [1, 1]} : vector<8x128xf32> to vector<8x32xf32>
    %179 = vector.extract_strided_slice %176 {offsets = [0, 64], sizes = [8, 32], strides = [1, 1]} : vector<8x128xf32> to vector<8x32xf32>
    %180 = vector.extract_strided_slice %175 {offsets = [0, 96], sizes = [8, 32], strides = [1, 1]} : vector<8x128xf32> to vector<8x32xf32>
    %181 = arith.mulf %178, %167 : vector<8x32xf32>
    %182 = arith.mulf %177, %179 : vector<8x32xf32>
    %183 = arith.addf %181, %182 : vector<8x32xf32>
    %184 = math.tanh %183 : vector<8x32xf32>
    %185 = arith.mulf %180, %184 : vector<8x32xf32>
    %186 = vector.extract_strided_slice %11 {offsets = [7, 0, 0], sizes = [1, 8, 32], strides = [1, 1, 1]} : vector<8x8x32xi1> to vector<1x8x32xi1>
    %187 = vector.shape_cast %186 : vector<1x8x32xi1> to vector<8x32xi1>
    %188 = arith.select %187, %185, %166 : vector<8x32xi1>, vector<8x32xf32>
    %c0_29 = arith.constant 0 : index
    %c0_30 = arith.constant 0 : index
    %189 = vector.load %arg7[%c0_29, %c0_30] : memref<32x8xf32, #tpu.memory_space<vmem>>, vector<32x8xf32>
    %cst_31 = arith.constant dense<0.000000e+00> : vector<8x8xf32>
    %190 = tpu.matmul %188, %189, %cst_31 {dimension_numbers = #tpu.dot_dimension_numbers<[1], [0], [0], [1], [0, 0, 1, 1], [], []>} : vector<8x32xf32>, vector<32x8xf32>, vector<8x8xf32> -> vector<8x8xf32>
    %c0_32 = arith.constant 0 : index
    %c0_33 = arith.constant 0 : index
    %191 = vector.load %arg8[%c0_32, %c0_33] : memref<1x8xf32, #tpu.memory_space<vmem>>, vector<1x8xf32>
    %192 = vector.broadcast %191 : vector<1x8xf32> to vector<8x8xf32>
    %193 = arith.addf %190, %192 : vector<8x8xf32>
    %cst_34 = arith.constant dense<0xFF800000> : vector<8xf32>
    %194 = vector.multi_reduction <maximumf>, %193, %cst_34 [1] : vector<8x8xf32> to vector<8xf32>
    %cst_35 = arith.constant 0xFF800000 : f32
    %195 = vector.broadcast %cst_35 : f32 to vector<8xf32>
    %196 = arith.maximumf %195, %194 : vector<8xf32>
    %197 = vector.shape_cast %196 : vector<8xf32> to vector<8x1xf32>
    %198 = vector.broadcast %197 : vector<8x1xf32> to vector<8x8xf32>
    %199 = arith.subf %193, %198 : vector<8x8xf32>
    %200 = math.exp %199 : vector<8x8xf32>
    %cst_36 = arith.constant dense<0.000000e+00> : vector<8xf32>
    %201 = vector.multi_reduction <add>, %200, %cst_36 [1] : vector<8x8xf32> to vector<8xf32>
    %202 = vector.shape_cast %201 : vector<8xf32> to vector<8x1xf32>
    %203 = math.log %202 : vector<8x1xf32>
    %204 = vector.broadcast %203 : vector<8x1xf32> to vector<8x8xf32>
    %205 = arith.subf %199, %204 : vector<8x8xf32>
    %c0_37 = arith.constant 0 : index
    %c0_38 = arith.constant 0 : index
    %206 = vector.load %arg9[%c0_37, %c0_38] : memref<8x8xf32, #tpu.memory_space<vmem>>, vector<8x8xf32>
    tpu.vector_store %arg9[%c0_37, %c0_38], %205 {strides = array<i32>} : memref<8x8xf32, #tpu.memory_space<vmem>>, vector<8x8xf32>,
    return
  }
}

</mosaic_0001>

<llo_original>
// kernel: tpu_custom_call.1
$region0: #{tpu_custom_call.1}
  #allocation0 [shape = 'u32[]', space=smem, size = 0x4, offset = 0x4, fixed_abs, tag = 'smem constant byte address 0x4 - core index']
  #allocation1 [shape = 'u32[144,128]{1,0:T(1,128)}', space=vmem, size = 0x12000, scoped, tag = 'internal scratch']
  %s0 = inlined_call_operand.vmem [shape: bf16[64,16], index: 0, kind: input, shape index: {}]
  %s1 = inlined_call_operand.vmem [shape: s32[8,1], index: 1, kind: input, shape index: {}]
  %s2 = inlined_call_operand.vmem [shape: f32[8,32], index: 2, kind: input, shape index: {}]
  %s3 = inlined_call_operand.vmem [shape: f32[8,32], index: 3, kind: input, shape index: {}]
  %s4 = inlined_call_operand.vmem [shape: bf16[16,128], index: 4, kind: input, shape index: {}]
  %s5 = inlined_call_operand.vmem [shape: f32[32,128], index: 5, kind: input, shape index: {}]
  %s6 = inlined_call_operand.vmem [shape: f32[1,128], index: 6, kind: input, shape index: {}]
  %s7 = inlined_call_operand.vmem [shape: f32[32,8], index: 7, kind: input, shape index: {}]
  %s8 = inlined_call_operand.vmem [shape: f32[1,8], index: 8, kind: input, shape index: {}]
  %s9 = inlined_call_operand.hbm [shape: f32[8,8], index: 9, kind: output, shape index: {}]
  %s10 = sld [smem:[#allocation0]]
  $region46: #{tpu_custom_call.1} parent=0
    _
  %s12 = ssub.s32 1, %s10
  %s13 = scalar_select 0, %s12, %s10
  $region1: #{tpu_custom_call.1} parent=0
    #allocation2 [shape = 'u8[4096]{0}', space=vmem, size = 0x1000, scoped, tag = 'output window, operand 0, single buffered']
    #allocation3 [shape = 's32[1]{0}', space=sflag, size = 0x4, scoped, tag = 'scoped memory for tpu_custom_call.1']
    %14 = vsyncpa [#allocation3], 0
    // Predicated region
    $region2: #{tpu_custom_call.1} parent=1 // pred_check
      _
    $region3: #{tpu_custom_call.1} parent=1 // pred_check_branch
      %16 = sbr.rel (0) target = $region5
    $region4: #{tpu_custom_call.1} parent=1 // pred_region
      _
    $region5: #{tpu_custom_call.1} parent=1 // pred_fallthru
      _
    // Predicated region
    $region6: #{tpu_custom_call.1} parent=1 // pred_check
      _
    $region7: #{tpu_custom_call.1} parent=1 // pred_check_branch
      %18 = sbr.rel (0) target = $region9
    $region8: #{tpu_custom_call.1} parent=1 // pred_region
      _
    $region9: #{tpu_custom_call.1} parent=1 // pred_fallthru
      _
    // Predicated region
    $region10: #{tpu_custom_call.1} parent=1 // pred_check
      _
    $region11: #{tpu_custom_call.1} parent=1 // pred_check_branch
      %20 = sbr.rel (0) target = $region13
    $region12: #{tpu_custom_call.1} parent=1 // pred_region
      _
    $region13: #{tpu_custom_call.1} parent=1 // pred_fallthru
      _
    // Predicated region
    $region14: #{tpu_custom_call.1} parent=1 // pred_check
      _
    $region15: #{tpu_custom_call.1} parent=1 // pred_check_branch
      %22 = sbr.rel (0) target = $region17
    $region16: #{tpu_custom_call.1} parent=1 // pred_region
      _
    $region17: #{tpu_custom_call.1} parent=1 // pred_fallthru
      _
    // Predicated region
    $region18: #{tpu_custom_call.1} parent=1 // pred_check
      _
    $region19: #{tpu_custom_call.1} parent=1 // pred_check_branch
      %24 = sbr.rel (0) target = $region21
    $region20: #{tpu_custom_call.1} parent=1 // pred_region
      _
    $region21: #{tpu_custom_call.1} parent=1 // pred_fallthru
      _
    // Predicated region
    $region22: #{tpu_custom_call.1} parent=1 // pred_check
      _
    $region23: #{tpu_custom_call.1} parent=1 // pred_check_branch
      %26 = sbr.rel (0) target = $region25
    $region24: #{tpu_custom_call.1} parent=1 // pred_region
      _
    $region25: #{tpu_custom_call.1} parent=1 // pred_fallthru
      _
    // Predicated region
    $region26: #{tpu_custom_call.1} parent=1 // pred_check
      _
    $region27: #{tpu_custom_call.1} parent=1 // pred_check_branch
      %28 = sbr.rel (0) target = $region29
    $region28: #{tpu_custom_call.1} parent=1 // pred_region
      _
    $region29: #{tpu_custom_call.1} parent=1 // pred_fallthru
      _
    // Predicated region
    $region30: #{tpu_custom_call.1} parent=1 // pred_check
      _
    $region31: #{tpu_custom_call.1} parent=1 // pred_check_branch
      %30 = sbr.rel (0) target = $region33
    $region32: #{tpu_custom_call.1} parent=1 // pred_region
      _
    $region33: #{tpu_custom_call.1} parent=1 // pred_fallthru
      _
    // Predicated region
    $region34: #{tpu_custom_call.1} parent=1 // pred_check
      _
    $region35: #{tpu_custom_call.1} parent=1 // pred_check_branch
      %32 = sbr.rel (0) target = $region37
    $region36: #{tpu_custom_call.1} parent=1 // pred_region
      _
    $region37: #{tpu_custom_call.1} parent=1 // pred_fallthru
      _
    %v34 = vld [vmem:[%s0] sm:$0xf]
    %v35 = vld [vmem:[%s0 + $0x4] sm:$0xf]
    %v36 = vld [vmem:[%s0 + $0x8] sm:$0xf]
    %v37 = vld [vmem:[%s0 + $0xc] sm:$0xf]
    %v38 = vld [vmem:[%s0 + $0x10] sm:$0xf]
    %v39 = vld [vmem:[%s0 + $0x14] sm:$0xf]
    %v40 = vld [vmem:[%s0 + $0x18] sm:$0xf]
    %v41 = vld [vmem:[%s0 + $0x1c] sm:$0xf]
    %v42 = vld [vmem:[%s4] sm:$0xf]
    %v43 = vld [vmem:[%s4 + $0x4] sm:$0xf]
    %v44 = vld [vmem:[%s6] sm:$0x1]
    %v46 = vlaneseq
    %v47 = vshrl.u32 %v46, 7
    %v48 = vsub.s32 0, %v47
    %v49 = vrot.slane %v44, %v48
    %v59 = vunpack.c.l.b16 %v34
    %v60 = vunpack.c.l.b16 %v35
    %v61 = vunpack.c.l.b16 %v36
    %v62 = vunpack.c.l.b16 %v37
    %v63 = vunpack.c.l.b16 %v38
    %v64 = vunpack.c.l.b16 %v39
    %v65 = vunpack.c.l.b16 %v40
    %v66 = vunpack.c.l.b16 %v41
    %v67 = vpack.c.b16 %v60, %v59
    %v68 = vpack.c.b16 %v62, %v61
    %v69 = vpack.c.b16 %v64, %v63
    %v70 = vpack.c.b16 %v66, %v65
    %v73 = vunpack.c.l.b16 %v42
    %v74 = vunpack.c.l.b16 %v43
    %v75 = vpack.c.b16 %v74, %v73
    %vm77 = vcmask 130048
    %v79 = vsel %vm77, %v67, 0
    %v82 = vsel %vm77, %v68, 0
    %v85 = vsel %vm77, %v69, 0
    %v88 = vsel %vm77, %v70, 0
    %90 = vmatprep.subr.bf16.mxu0 0
    %91 = vmatpush1.bf16.msra.mxu0 0
    %92 = vmatprep.subr.bf16.mxu0 0
    %93 = vmatpush1.bf16.msra.mxu0 0
    %94 = vmatprep.subr.bf16.mxu0 0
    %95 = vmatpush1.bf16.msra.mxu0 0
    %96 = vmatprep.subr.bf16.mxu0 0
    %97 = vmatpush1.bf16.msra.mxu0 0
    %98 = vmatprep.subr.bf16.mxu0 0
    %99 = vmatpush1.bf16.msra.mxu0 0
    %100 = vmatprep.subr.bf16.mxu0 0
    %101 = vmatpush1.bf16.msra.mxu0 0
    %102 = vmatprep.subr.bf16.mxu0 0
    %103 = vmatpush1.bf16.msra.mxu0 0
    %104 = vmatprep.subr.bf16.mxu0 0
    %105 = vmatpush1.bf16.msra.mxu0 %v75
    %106 = vmatprep.subr.bf16.mxu0 0
    %107 = vmatpush2.bf16.msra.mxu0 0
    %108 = vmatprep.subr.bf16.mxu0 0
    %109 = vmatpush2.bf16.msra.mxu0 0
    %110 = vmatprep.subr.bf16.mxu0 0
    %111 = vmatpush2.bf16.msra.mxu0 0
    %112 = vmatprep.subr.bf16.mxu0 0
    %113 = vmatpush2.bf16.msra.mxu0 0
    %114 = vmatprep.subr.bf16.mxu0 0
    %115 = vmatpush2.bf16.msra.mxu0 0
    %116 = vmatprep.subr.bf16.mxu0 0
    %117 = vmatpush2.bf16.msra.mxu0 0
    %118 = vmatprep.subr.bf16.mxu0 0
    %119 = vmatpush2.bf16.msra.mxu0 0
    %120 = vmatprep.subr.bf16.mxu0 0
    %121 = vmatpush2.bf16.msra.mxu0 0
    %122 = vmatprep.mubr.bf16.mxu0 0
    %123 = vmatmul.mubr.bf16.gmra.mxu0 %v79
    %v124 = vpop.f32.mrf.mxu0
    %v125 = vadd.f32 %v49, %v124
    %v126 = vpop.f32.mrf.mxu0
    %v127 = vpop.f32.mrf.mxu0
    %v128 = vadd.f32 %v49, %v127
    %v129 = vpop.f32.mrf.mxu0
    %130 = vmatprep.mubr.bf16.mxu0 0
    %131 = vmatmul.mubr.bf16.gmra.mxu0 %v82
    %v132 = vpop.f32.mrf.mxu0
    %v133 = vadd.f32 %v49, %v132
    %v134 = vpop.f32.mrf.mxu0
    %v135 = vpop.f32.mrf.mxu0
    %v136 = vadd.f32 %v49, %v135
    %v137 = vpop.f32.mrf.mxu0
    %138 = vmatprep.mubr.bf16.mxu0 0
    %139 = vmatmul.mubr.bf16.gmra.mxu0 %v85
    %v140 = vpop.f32.mrf.mxu0
    %v141 = vadd.f32 %v49, %v140
    %v142 = vpop.f32.mrf.mxu0
    %v143 = vpop.f32.mrf.mxu0
    %v144 = vadd.f32 %v49, %v143
    %v145 = vpop.f32.mrf.mxu0
    %146 = vmatprep.mubr.bf16.mxu0 0
    %147 = vmatmul.mubr.bf16.gmra.mxu0 %v88
    %v148 = vpop.f32.mrf.mxu0
    %v149 = vadd.f32 %v49, %v148
    %v150 = vpop.f32.mrf.mxu0
    %v151 = vpop.f32.mrf.mxu0
    %v152 = vadd.f32 %v49, %v151
    %v153 = vpop.f32.mrf.mxu0
    %154 = vdwg.mxu0
    %v155 = vld [vmem:[%s5] sm:$0xff]
    %v156 = vld [vmem:[%s5 + $0x8] sm:$0xff]
    %v157 = vld [vmem:[%s5 + $0x10] sm:$0xff]
    %v158 = vld [vmem:[%s5 + $0x18] sm:$0xff]
    %v159 = vld [vmem:[%s1] sm:$0xff]
    %160 = vset.pattern.permute.xlu0 0
    %161 = vperm.xlu0 %160, %v159
    %v162 = vpop.permute.xlu0 %161
    %vm163 = vcmp.gt.s32.totalorder %v162, 0
    %vm164 = vcmp.gt.s32.totalorder %v162, 1
    %vm165 = vcmp.gt.s32.totalorder %v162, 2
    %vm166 = vcmp.gt.s32.totalorder %v162, 3
    %vm167 = vcmp.gt.s32.totalorder %v162, 4
    %vm168 = vcmp.gt.s32.totalorder %v162, 5
    %vm169 = vcmp.gt.s32.totalorder %v162, 6
    %vm170 = vcmp.gt.s32.totalorder %v162, 7
    %v171 = vld [vmem:[%s2] sm:$0xff]
    %v172 = vld [vmem:[%s3] sm:$0xff]
    %vm173 = vcmask 261120
    %v175 = vsel %vm173, %v171, 0
    %177 = vmatprep.subr.mxu0 0.0
    %178 = vmatpush1.msra.mxu0 0.0
    %179 = vmatprep.subr.mxu0 0.0
    %180 = vmatpush1.msra.mxu0 0.0
    %181 = vmatprep.subr.mxu0 0.0
    %182 = vmatpush1.msra.mxu0 0.0
    %183 = vmatprep.subr.mxu0 0.0
    %184 = vmatpush1.msra.mxu0 0.0
    %185 = vmatprep.subr.mxu0 0.0
    %186 = vmatpush1.msra.mxu0 0.0
    %187 = vmatprep.subr.mxu0 0.0
    %188 = vmatpush1.msra.mxu0 0.0
    %189 = vmatprep.subr.mxu0 0.0
    %190 = vmatpush1.msra.mxu0 0.0
    %191 = vmatprep.subr.mxu0 0.0
    %192 = vmatpush1.msra.mxu0 0.0
    %193 = vmatprep.subr.mxu0 0.0
    %194 = vmatpush1.msra.mxu0 0.0
    %195 = vmatprep.subr.mxu0 0.0
    %196 = vmatpush1.msra.mxu0 0.0
    %197 = vmatprep.subr.mxu0 0.0
    %198 = vmatpush1.msra.mxu0 0.0
    %199 = vmatprep.subr.mxu0 0.0
    %200 = vmatpush1.msra.mxu0 0.0
    %201 = vmatprep.subr.mxu0 0.0
    %202 = vmatpush1.msra.mxu0 %v158
    %203 = vmatprep.subr.mxu0 0.0
    %204 = vmatpush1.msra.mxu0 %v157
    %205 = vmatprep.subr.mxu0 0.0
    %206 = vmatpush1.msra.mxu0 %v156
    %207 = vmatprep.subr.mxu0 0.0
    %208 = vmatpush1.msra.mxu0 %v155
    %209 = vmatprep.subr.mxu0 0.0
    %210 = vmatpush2.msra.mxu0 0.0
    %211 = vmatprep.subr.mxu0 0.0
    %212 = vmatpush2.msra.mxu0 0.0
    %213 = vmatprep.subr.mxu0 0.0
    %214 = vmatpush2.msra.mxu0 0.0
    %215 = vmatprep.subr.mxu0 0.0
    %216 = vmatpush2.msra.mxu0 0.0
    %217 = vmatprep.subr.mxu0 0.0
    %218 = vmatpush2.msra.mxu0 0.0
    %219 = vmatprep.subr.mxu0 0.0
    %220 = vmatpush2.msra.mxu0 0.0
    %221 = vmatprep.subr.mxu0 0.0
    %222 = vmatpush2.msra.mxu0 0.0
    %223 = vmatprep.subr.mxu0 0.0
    %224 = vmatpush2.msra.mxu0 0.0
    %225 = vmatprep.subr.mxu0 0.0
    %226 = vmatpush2.msra.mxu0 0.0
    %227 = vmatprep.subr.mxu0 0.0
    %228 = vmatpush2.msra.mxu0 0.0
    %229 = vmatprep.subr.mxu0 0.0
    %230 = vmatpush2.msra.mxu0 0.0
    %231 = vmatprep.subr.mxu0 0.0
    %232 = vmatpush2.msra.mxu0 0.0
    %233 = vmatprep.subr.mxu0 0.0
    %234 = vmatpush2.msra.mxu0 0.0
    %235 = vmatprep.subr.mxu0 0.0
    %236 = vmatpush2.msra.mxu0 0.0
    %237 = vmatprep.subr.mxu0 0.0
    %238 = vmatpush2.msra.mxu0 0.0
    %239 = vmatprep.subr.mxu0 0.0
    %240 = vmatpush2.msra.mxu0 0.0
    %241 = vmatprep.mubr.f32.mxu0 0.0
    %242 = vmatmul.mubr.f32.gmra.mxu0 %v175
    %v243 = vpop.f32.mrf.mxu0
    %v244 = vadd.f32 0.0, %v243
    %v245 = vpop.f32.mrf.mxu0
    %246 = vdwg.mxu0
    %v247 = vadd.f32 %v125, %v244
    %v248 = vxor.u32 %v247, 2147483648
    %v249 = vmul.f32 %v248, 1.442695
    %v250 = vpow.pop %v249
    %v251 = vadd.f32 %v250, 1.0
    %v252 = vrcp.pop %v251
    %v253 = vmul.f32 1.0, %v252
    %v254 = vtanh.pop %v247
    %256 = vrot.lane.b32.xlu0 %v172, 32
    %v257 = vpop.permute.xlu0 %256
    %v259 = vmul.f32 %v253, %v257
    %261 = vrot.lane.b32.xlu0 %v254, 64
    %v262 = vpop.permute.xlu0 %261
    %v264 = vmul.f32 %v253, %v262
    %266 = vrot.lane.b32.xlu0 %v264, 32
    %v267 = vpop.permute.xlu0 %266
    %v269 = vadd.f32 %v259, %v267
    %v270 = vtanh.pop %v269
    %272 = vrot.lane.b32.xlu0 %v270, 64
    %v273 = vpop.permute.xlu0 %272
    %v275 = vmul.f32 %v253, %v273
    %276 = vrot.lane.b32.xlu0 %v171, 96
    %v277 = vpop.permute.xlu0 %276
    %v279 = vsel %vm163, %v275, %v277
    %v280 = vsel %vm163, %v269, %v257
    %282 = vrot.lane.b32.xlu0 %v279, 32
    %v283 = vpop.permute.xlu0 %282
    %v284 = vsel %vm173, %v283, 0
    %286 = vmatprep.subr.mxu0 0.0
    %287 = vmatpush1.msra.mxu0 0.0
    %288 = vmatprep.subr.mxu0 0.0
    %289 = vmatpush1.msra.mxu0 0.0
    %290 = vmatprep.subr.mxu0 0.0
    %291 = vmatpush1.msra.mxu0 0.0
    %292 = vmatprep.subr.mxu0 0.0
    %293 = vmatpush1.msra.mxu0 0.0
    %294 = vmatprep.subr.mxu0 0.0
    %295 = vmatpush1.msra.mxu0 0.0
    %296 = vmatprep.subr.mxu0 0.0
    %297 = vmatpush1.msra.mxu0 0.0
    %298 = vmatprep.subr.mxu0 0.0
    %299 = vmatpush1.msra.mxu0 0.0
    %300 = vmatprep.subr.mxu0 0.0
    %301 = vmatpush1.msra.mxu0 0.0
    %302 = vmatprep.subr.mxu0 0.0
    %303 = vmatpush1.msra.mxu0 0.0
    %304 = vmatprep.subr.mxu0 0.0
    %305 = vmatpush1.msra.mxu0 0.0
    %306 = vmatprep.subr.mxu0 0.0
    %307 = vmatpush1.msra.mxu0 0.0
    %308 = vmatprep.subr.mxu0 0.0
    %309 = vmatpush1.msra.mxu0 0.0
    %310 = vmatprep.subr.mxu0 0.0
    %311 = vmatpush1.msra.mxu0 %v158
    %312 = vmatprep.subr.mxu0 0.0
    %313 = vmatpush1.msra.mxu0 %v157
    %314 = vmatprep.subr.mxu0 0.0
    %315 = vmatpush1.msra.mxu0 %v156
    %316 = vmatprep.subr.mxu0 0.0
    %317 = vmatpush1.msra.mxu0 %v155
    %318 = vmatprep.subr.mxu0 0.0
    %319 = vmatpush2.msra.mxu0 0.0
    %320 = vmatprep.subr.mxu0 0.0
    %321 = vmatpush2.msra.mxu0 0.0
    %322 = vmatprep.subr.mxu0 0.0
    %323 = vmatpush2.msra.mxu0 0.0
    %324 = vmatprep.subr.mxu0 0.0
    %325 = vmatpush2.msra.mxu0 0.0
    %326 = vmatprep.subr.mxu0 0.0
    %327 = vmatpush2.msra.mxu0 0.0
    %328 = vmatprep.subr.mxu0 0.0
    %329 = vmatpush2.msra.mxu0 0.0
    %330 = vmatprep.subr.mxu0 0.0
    %331 = vmatpush2.msra.mxu0 0.0
    %332 = vmatprep.subr.mxu0 0.0
    %333 = vmatpush2.msra.mxu0 0.0
    %334 = vmatprep.subr.mxu0 0.0
    %335 = vmatpush2.msra.mxu0 0.0
    %336 = vmatprep.subr.mxu0 0.0
    %337 = vmatpush2.msra.mxu0 0.0
    %338 = vmatprep.subr.mxu0 0.0
    %339 = vmatpush2.msra.mxu0 0.0
    %340 = vmatprep.subr.mxu0 0.0
    %341 = vmatpush2.msra.mxu0 0.0
    %342 = vmatprep.subr.mxu0 0.0
    %343 = vmatpush2.msra.mxu0 0.0
    %344 = vmatprep.subr.mxu0 0.0
    %345 = vmatpush2.msra.mxu0 0.0
    %346 = vmatprep.subr.mxu0 0.0
    %347 = vmatpush2.msra.mxu0 0.0
    %348 = vmatprep.subr.mxu0 0.0
    %349 = vmatpush2.msra.mxu0 0.0
    %350 = vmatprep.mubr.f32.mxu0 0.0
    %351 = vmatmul.mubr.f32.gmra.mxu0 %v284
    %v352 = vpop.f32.mrf.mxu0
    %v353 = vadd.f32 0.0, %v352
    %v354 = vpop.f32.mrf.mxu0
    %355 = vdwg.mxu0
    %v356 = vadd.f32 %v128, %v353
    %v357 = vxor.u32 %v356, 2147483648
    %v358 = vmul.f32 %v357, 1.442695
    %v359 = vpow.pop %v358
    %v360 = vadd.f32 %v359, 1.0
    %v361 = vrcp.pop %v360
    %v362 = vmul.f32 1.0, %v361
    %v363 = vtanh.pop %v356
    %v364 = vmul.f32 %v362, %v280
    %366 = vrot.lane.b32.xlu0 %v363, 64
    %v367 = vpop.permute.xlu0 %366
    %v369 = vmul.f32 %v362, %v367
    %371 = vrot.lane.b32.xlu0 %v369, 32
    %v372 = vpop.permute.xlu0 %371
    %v374 = vadd.f32 %v364, %v372
    %v375 = vtanh.pop %v374
    %377 = vrot.lane.b32.xlu0 %v375, 64
    %v378 = vpop.permute.xlu0 %377
    %v380 = vmul.f32 %v362, %v378
    %v381 = vsel %vm164, %v380, %v279
    %v382 = vsel %vm164, %v374, %v280
    %384 = vrot.lane.b32.xlu0 %v381, 32
    %v385 = vpop.permute.xlu0 %384
    %v386 = vsel %vm173, %v385, 0
    %388 = vmatprep.subr.mxu0 0.0
    %389 = vmatpush1.msra.mxu0 0.0
    %390 = vmatprep.subr.mxu0 0.0
    %391 = vmatpush1.msra.mxu0 0.0
    %392 = vmatprep.subr.mxu0 0.0
    %393 = vmatpush1.msra.mxu0 0.0
    %394 = vmatprep.subr.mxu0 0.0
    %395 = vmatpush1.msra.mxu0 0.0
    %396 = vmatprep.subr.mxu0 0.0
    %397 = vmatpush1.msra.mxu0 0.0
    %398 = vmatprep.subr.mxu0 0.0
    %399 = vmatpush1.msra.mxu0 0.0
    %400 = vmatprep.subr.mxu0 0.0
    %401 = vmatpush1.msra.mxu0 0.0
    %402 = vmatprep.subr.mxu0 0.0
    %403 = vmatpush1.msra.mxu0 0.0
    %404 = vmatprep.subr.mxu0 0.0
    %405 = vmatpush1.msra.mxu0 0.0
    %406 = vmatprep.subr.mxu0 0.0
    %407 = vmatpush1.msra.mxu0 0.0
    %408 = vmatprep.subr.mxu0 0.0
    %409 = vmatpush1.msra.mxu0 0.0
    %410 = vmatprep.subr.mxu0 0.0
    %411 = vmatpush1.msra.mxu0 0.0
    %412 = vmatprep.subr.mxu0 0.0
    %413 = vmatpush1.msra.mxu0 %v158
    %414 = vmatprep.subr.mxu0 0.0
    %415 = vmatpush1.msra.mxu0 %v157
    %416 = vmatprep.subr.mxu0 0.0
    %417 = vmatpush1.msra.mxu0 %v156
    %418 = vmatprep.subr.mxu0 0.0
    %419 = vmatpush1.msra.mxu0 %v155
    %420 = vmatprep.subr.mxu0 0.0
    %421 = vmatpush2.msra.mxu0 0.0
    %422 = vmatprep.subr.mxu0 0.0
    %423 = vmatpush2.msra.mxu0 0.0
    %424 = vmatprep.subr.mxu0 0.0
    %425 = vmatpush2.msra.mxu0 0.0
    %426 = vmatprep.subr.mxu0 0.0
    %427 = vmatpush2.msra.mxu0 0.0
    %428 = vmatprep.subr.mxu0 0.0
    %429 = vmatpush2.msra.mxu0 0.0
    %430 = vmatprep.subr.mxu0 0.0
    %431 = vmatpush2.msra.mxu0 0.0
    %432 = vmatprep.subr.mxu0 0.0
    %433 = vmatpush2.msra.mxu0 0.0
    %434 = vmatprep.subr.mxu0 0.0
    %435 = vmatpush2.msra.mxu0 0.0
    %436 = vmatprep.subr.mxu0 0.0
    %437 = vmatpush2.msra.mxu0 0.0
    %438 = vmatprep.subr.mxu0 0.0
    %439 = vmatpush2.msra.mxu0 0.0
    %440 = vmatprep.subr.mxu0 0.0
    %441 = vmatpush2.msra.mxu0 0.0
    %442 = vmatprep.subr.mxu0 0.0
    %443 = vmatpush2.msra.mxu0 0.0
    %444 = vmatprep.subr.mxu0 0.0
    %445 = vmatpush2.msra.mxu0 0.0
    %446 = vmatprep.subr.mxu0 0.0
    %447 = vmatpush2.msra.mxu0 0.0
    %448 = vmatprep.subr.mxu0 0.0
    %449 = vmatpush2.msra.mxu0 0.0
    %450 = vmatprep.subr.mxu0 0.0
    %451 = vmatpush2.msra.mxu0 0.0
    %452 = vmatprep.mubr.f32.mxu0 0.0
    %453 = vmatmul.mubr.f32.gmra.mxu0 %v386
    %v454 = vpop.f32.mrf.mxu0
    %v455 = vadd.f32 0.0, %v454
    %v456 = vpop.f32.mrf.mxu0
    %457 = vdwg.mxu0
    %v458 = vadd.f32 %v133, %v455
    %v459 = vxor.u32 %v458, 2147483648
    %v460 = vmul.f32 %v459, 1.442695
    %v461 = vpow.pop %v460
    %v462 = vadd.f32 %v461, 1.0
    %v463 = vrcp.pop %v462
    %v464 = vmul.f32 1.0, %v463
    %v465 = vtanh.pop %v458
    %v466 = vmul.f32 %v464, %v382
    %468 = vrot.lane.b32.xlu0 %v465, 64
    %v469 = vpop.permute.xlu0 %468
    %v471 = vmul.f32 %v464, %v469
    %473 = vrot.lane.b32.xlu0 %v471, 32
    %v474 = vpop.permute.xlu0 %473
    %v476 = vadd.f32 %v466, %v474
    %v477 = vtanh.pop %v476
    %479 = vrot.lane.b32.xlu0 %v477, 64
    %v480 = vpop.permute.xlu0 %479
    %v482 = vmul.f32 %v464, %v480
    %v483 = vsel %vm165, %v482, %v381
    %v484 = vsel %vm165, %v476, %v382
    %486 = vrot.lane.b32.xlu0 %v483, 32
    %v487 = vpop.permute.xlu0 %486
    %v488 = vsel %vm173, %v487, 0
    %490 = vmatprep.subr.mxu0 0.0
    %491 = vmatpush1.msra.mxu0 0.0
    %492 = vmatprep.subr.mxu0 0.0
    %493 = vmatpush1.msra.mxu0 0.0
    %494 = vmatprep.subr.mxu0 0.0
    %495 = vmatpush1.msra.mxu0 0.0
    %496 = vmatprep.subr.mxu0 0.0
    %497 = vmatpush1.msra.mxu0 0.0
    %498 = vmatprep.subr.mxu0 0.0
    %499 = vmatpush1.msra.mxu0 0.0
    %500 = vmatprep.subr.mxu0 0.0
    %501 = vmatpush1.msra.mxu0 0.0
    %502 = vmatprep.subr.mxu0 0.0
    %503 = vmatpush1.msra.mxu0 0.0
    %504 = vmatprep.subr.mxu0 0.0
    %505 = vmatpush1.msra.mxu0 0.0
    %506 = vmatprep.subr.mxu0 0.0
    %507 = vmatpush1.msra.mxu0 0.0
    %508 = vmatprep.subr.mxu0 0.0
    %509 = vmatpush1.msra.mxu0 0.0
    %510 = vmatprep.subr.mxu0 0.0
    %511 = vmatpush1.msra.mxu0 0.0
    %512 = vmatprep.subr.mxu0 0.0
    %513 = vmatpush1.msra.mxu0 0.0
    %514 = vmatprep.subr.mxu0 0.0
    %515 = vmatpush1.msra.mxu0 %v158
    %516 = vmatprep.subr.mxu0 0.0
    %517 = vmatpush1.msra.mxu0 %v157
    %518 = vmatprep.subr.mxu0 0.0
    %519 = vmatpush1.msra.mxu0 %v156
    %520 = vmatprep.subr.mxu0 0.0
    %521 = vmatpush1.msra.mxu0 %v155
    %522 = vmatprep.subr.mxu0 0.0
    %523 = vmatpush2.msra.mxu0 0.0
    %524 = vmatprep.subr.mxu0 0.0
    %525 = vmatpush2.msra.mxu0 0.0
    %526 = vmatprep.subr.mxu0 0.0
    %527 = vmatpush2.msra.mxu0 0.0
    %528 = vmatprep.subr.mxu0 0.0
    %529 = vmatpush2.msra.mxu0 0.0
    %530 = vmatprep.subr.mxu0 0.0
    %531 = vmatpush2.msra.mxu0 0.0
    %532 = vmatprep.subr.mxu0 0.0
    %533 = vmatpush2.msra.mxu0 0.0
    %534 = vmatprep.subr.mxu0 0.0
    %535 = vmatpush2.msra.mxu0 0.0
    %536 = vmatprep.subr.mxu0 0.0
    %537 = vmatpush2.msra.mxu0 0.0
    %538 = vmatprep.subr.mxu0 0.0
    %539 = vmatpush2.msra.mxu0 0.0
    %540 = vmatprep.subr.mxu0 0.0
    %541 = vmatpush2.msra.mxu0 0.0
    %542 = vmatprep.subr.mxu0 0.0
    %543 = vmatpush2.msra.mxu0 0.0
    %544 = vmatprep.subr.mxu0 0.0
    %545 = vmatpush2.msra.mxu0 0.0
    %546 = vmatprep.subr.mxu0 0.0
    %547 = vmatpush2.msra.mxu0 0.0
    %548 = vmatprep.subr.mxu0 0.0
    %549 = vmatpush2.msra.mxu0 0.0
    %550 = vmatprep.subr.mxu0 0.0
    %551 = vmatpush2.msra.mxu0 0.0
    %552 = vmatprep.subr.mxu0 0.0
    %553 = vmatpush2.msra.mxu0 0.0
    %554 = vmatprep.mubr.f32.mxu0 0.0
    %555 = vmatmul.mubr.f32.gmra.mxu0 %v488
    %v556 = vpop.f32.mrf.mxu0
    %v557 = vadd.f32 0.0, %v556
    %v558 = vpop.f32.mrf.mxu0
    %559 = vdwg.mxu0
    %v560 = vadd.f32 %v136, %v557
    %v561 = vxor.u32 %v560, 2147483648
    %v562 = vmul.f32 %v561, 1.442695
    %v563 = vpow.pop %v562
    %v564 = vadd.f32 %v563, 1.0
    %v565 = vrcp.pop %v564
    %v566 = vmul.f32 1.0, %v565
    %v567 = vtanh.pop %v560
    %v568 = vmul.f32 %v566, %v484
    %570 = vrot.lane.b32.xlu0 %v567, 64
    %v571 = vpop.permute.xlu0 %570
    %v573 = vmul.f32 %v566, %v571
    %575 = vrot.lane.b32.xlu0 %v573, 32
    %v576 = vpop.permute.xlu0 %575
    %v578 = vadd.f32 %v568, %v576
    %v579 = vtanh.pop %v578
    %581 = vrot.lane.b32.xlu0 %v579, 64
    %v582 = vpop.permute.xlu0 %581
    %v584 = vmul.f32 %v566, %v582
    %v585 = vsel %vm166, %v584, %v483
    %v586 = vsel %vm166, %v578, %v484
    %588 = vrot.lane.b32.xlu0 %v585, 32
    %v589 = vpop.permute.xlu0 %588
    %v590 = vsel %vm173, %v589, 0
    %592 = vmatprep.subr.mxu0 0.0
    %593 = vmatpush1.msra.mxu0 0.0
    %594 = vmatprep.subr.mxu0 0.0
    %595 = vmatpush1.msra.mxu0 0.0
    %596 = vmatprep.subr.mxu0 0.0
    %597 = vmatpush1.msra.mxu0 0.0
    %598 = vmatprep.subr.mxu0 0.0
    %599 = vmatpush1.msra.mxu0 0.0
    %600 = vmatprep.subr.mxu0 0.0
    %601 = vmatpush1.msra.mxu0 0.0
    %602 = vmatprep.subr.mxu0 0.0
    %603 = vmatpush1.msra.mxu0 0.0
    %604 = vmatprep.subr.mxu0 0.0
    %605 = vmatpush1.msra.mxu0 0.0
    %606 = vmatprep.subr.mxu0 0.0
    %607 = vmatpush1.msra.mxu0 0.0
    %608 = vmatprep.subr.mxu0 0.0
    %609 = vmatpush1.msra.mxu0 0.0
    %610 = vmatprep.subr.mxu0 0.0
    %611 = vmatpush1.msra.mxu0 0.0
    %612 = vmatprep.subr.mxu0 0.0
    %613 = vmatpush1.msra.mxu0 0.0
    %614 = vmatprep.subr.mxu0 0.0
    %615 = vmatpush1.msra.mxu0 0.0
    %616 = vmatprep.subr.mxu0 0.0
    %617 = vmatpush1.msra.mxu0 %v158
    %618 = vmatprep.subr.mxu0 0.0
    %619 = vmatpush1.msra.mxu0 %v157
    %620 = vmatprep.subr.mxu0 0.0
    %621 = vmatpush1.msra.mxu0 %v156
    %622 = vmatprep.subr.mxu0 0.0
    %623 = vmatpush1.msra.mxu0 %v155
    %624 = vmatprep.subr.mxu0 0.0
    %625 = vmatpush2.msra.mxu0 0.0
    %626 = vmatprep.subr.mxu0 0.0
    %627 = vmatpush2.msra.mxu0 0.0
    %628 = vmatprep.subr.mxu0 0.0
    %629 = vmatpush2.msra.mxu0 0.0
    %630 = vmatprep.subr.mxu0 0.0
    %631 = vmatpush2.msra.mxu0 0.0
    %632 = vmatprep.subr.mxu0 0.0
    %633 = vmatpush2.msra.mxu0 0.0
    %634 = vmatprep.subr.mxu0 0.0
    %635 = vmatpush2.msra.mxu0 0.0
    %636 = vmatprep.subr.mxu0 0.0
    %637 = vmatpush2.msra.mxu0 0.0
    %638 = vmatprep.subr.mxu0 0.0
    %639 = vmatpush2.msra.mxu0 0.0
    %640 = vmatprep.subr.mxu0 0.0
    %641 = vmatpush2.msra.mxu0 0.0
    %642 = vmatprep.subr.mxu0 0.0
    %643 = vmatpush2.msra.mxu0 0.0
    %644 = vmatprep.subr.mxu0 0.0
    %645 = vmatpush2.msra.mxu0 0.0
    %646 = vmatprep.subr.mxu0 0.0
    %647 = vmatpush2.msra.mxu0 0.0
    %648 = vmatprep.subr.mxu0 0.0
    %649 = vmatpush2.msra.mxu0 0.0
    %650 = vmatprep.subr.mxu0 0.0
    %651 = vmatpush2.msra.mxu0 0.0
    %652 = vmatprep.subr.mxu0 0.0
    %653 = vmatpush2.msra.mxu0 0.0
    %654 = vmatprep.subr.mxu0 0.0
    %655 = vmatpush2.msra.mxu0 0.0
    %656 = vmatprep.mubr.f32.mxu0 0.0
    %657 = vmatmul.mubr.f32.gmra.mxu0 %v590
    %v658 = vpop.f32.mrf.mxu0
    %v659 = vadd.f32 0.0, %v658
    %v660 = vpop.f32.mrf.mxu0
    %661 = vdwg.mxu0
    %v662 = vadd.f32 %v141, %v659
    %v663 = vxor.u32 %v662, 2147483648
    %v664 = vmul.f32 %v663, 1.442695
    %v665 = vpow.pop %v664
    %v666 = vadd.f32 %v665, 1.0
    %v667 = vrcp.pop %v666
    %v668 = vmul.f32 1.0, %v667
    %v669 = vtanh.pop %v662
    %v670 = vmul.f32 %v668, %v586
    %672 = vrot.lane.b32.xlu0 %v669, 64
    %v673 = vpop.permute.xlu0 %672
    %v675 = vmul.f32 %v668, %v673
    %677 = vrot.lane.b32.xlu0 %v675, 32
    %v678 = vpop.permute.xlu0 %677
    %v680 = vadd.f32 %v670, %v678
    %v681 = vtanh.pop %v680
    %683 = vrot.lane.b32.xlu0 %v681, 64
    %v684 = vpop.permute.xlu0 %683
    %v686 = vmul.f32 %v668, %v684
    %v687 = vsel %vm167, %v686, %v585
    %v688 = vsel %vm167, %v680, %v586
    %690 = vrot.lane.b32.xlu0 %v687, 32
    %v691 = vpop.permute.xlu0 %690
    %v692 = vsel %vm173, %v691, 0
    %694 = vmatprep.subr.mxu0 0.0
    %695 = vmatpush1.msra.mxu0 0.0
    %696 = vmatprep.subr.mxu0 0.0
    %697 = vmatpush1.msra.mxu0 0.0
    %698 = vmatprep.subr.mxu0 0.0
    %699 = vmatpush1.msra.mxu0 0.0
    %700 = vmatprep.subr.mxu0 0.0
    %701 = vmatpush1.msra.mxu0 0.0
    %702 = vmatprep.subr.mxu0 0.0
    %703 = vmatpush1.msra.mxu0 0.0
    %704 = vmatprep.subr.mxu0 0.0
    %705 = vmatpush1.msra.mxu0 0.0
    %706 = vmatprep.subr.mxu0 0.0
    %707 = vmatpush1.msra.mxu0 0.0
    %708 = vmatprep.subr.mxu0 0.0
    %709 = vmatpush1.msra.mxu0 0.0
    %710 = vmatprep.subr.mxu0 0.0
    %711 = vmatpush1.msra.mxu0 0.0
    %712 = vmatprep.subr.mxu0 0.0
    %713 = vmatpush1.msra.mxu0 0.0
    %714 = vmatprep.subr.mxu0 0.0
    %715 = vmatpush1.msra.mxu0 0.0
    %716 = vmatprep.subr.mxu0 0.0
    %717 = vmatpush1.msra.mxu0 0.0
    %718 = vmatprep.subr.mxu0 0.0
    %719 = vmatpush1.msra.mxu0 %v158
    %720 = vmatprep.subr.mxu0 0.0
    %721 = vmatpush1.msra.mxu0 %v157
    %722 = vmatprep.subr.mxu0 0.0
    %723 = vmatpush1.msra.mxu0 %v156
    %724 = vmatprep.subr.mxu0 0.0
    %725 = vmatpush1.msra.mxu0 %v155
    %726 = vmatprep.subr.mxu0 0.0
    %727 = vmatpush2.msra.mxu0 0.0
    %728 = vmatprep.subr.mxu0 0.0
    %729 = vmatpush2.msra.mxu0 0.0
    %730 = vmatprep.subr.mxu0 0.0
    %731 = vmatpush2.msra.mxu0 0.0
    %732 = vmatprep.subr.mxu0 0.0
    %733 = vmatpush2.msra.mxu0 0.0
    %734 = vmatprep.subr.mxu0 0.0
    %735 = vmatpush2.msra.mxu0 0.0
    %736 = vmatprep.subr.mxu0 0.0
    %737 = vmatpush2.msra.mxu0 0.0
    %738 = vmatprep.subr.mxu0 0.0
    %739 = vmatpush2.msra.mxu0 0.0
    %740 = vmatprep.subr.mxu0 0.0
    %741 = vmatpush2.msra.mxu0 0.0
    %742 = vmatprep.subr.mxu0 0.0
    %743 = vmatpush2.msra.mxu0 0.0
    %744 = vmatprep.subr.mxu0 0.0
    %745 = vmatpush2.msra.mxu0 0.0
    %746 = vmatprep.subr.mxu0 0.0
    %747 = vmatpush2.msra.mxu0 0.0
    %748 = vmatprep.subr.mxu0 0.0
    %749 = vmatpush2.msra.mxu0 0.0
    %750 = vmatprep.subr.mxu0 0.0
    %751 = vmatpush2.msra.mxu0 0.0
    %752 = vmatprep.subr.mxu0 0.0
    %753 = vmatpush2.msra.mxu0 0.0
    %754 = vmatprep.subr.mxu0 0.0
    %755 = vmatpush2.msra.mxu0 0.0
    %756 = vmatprep.subr.mxu0 0.0
    %757 = vmatpush2.msra.mxu0 0.0
    %758 = vmatprep.mubr.f32.mxu0 0.0
    %759 = vmatmul.mubr.f32.gmra.mxu0 %v692
    %v760 = vpop.f32.mrf.mxu0
    %v761 = vadd.f32 0.0, %v760
    %v762 = vpop.f32.mrf.mxu0
    %763 = vdwg.mxu0
    %v764 = vadd.f32 %v144, %v761
    %v765 = vxor.u32 %v764, 2147483648
    %v766 = vmul.f32 %v765, 1.442695
    %v767 = vpow.pop %v766
    %v768 = vadd.f32 %v767, 1.0
    %v769 = vrcp.pop %v768
    %v770 = vmul.f32 1.0, %v769
    %v771 = vtanh.pop %v764
    %v772 = vmul.f32 %v770, %v688
    %774 = vrot.lane.b32.xlu0 %v771, 64
    %v775 = vpop.permute.xlu0 %774
    %v777 = vmul.f32 %v770, %v775
    %779 = vrot.lane.b32.xlu0 %v777, 32
    %v780 = vpop.permute.xlu0 %779
    %v782 = vadd.f32 %v772, %v780
    %v783 = vtanh.pop %v782
    %785 = vrot.lane.b32.xlu0 %v783, 64
    %v786 = vpop.permute.xlu0 %785
    %v788 = vmul.f32 %v770, %v786
    %v789 = vsel %vm168, %v788, %v687
    %v790 = vsel %vm168, %v782, %v688
    %792 = vrot.lane.b32.xlu0 %v789, 32
    %v793 = vpop.permute.xlu0 %792
    %v794 = vsel %vm173, %v793, 0
    %796 = vmatprep.subr.mxu0 0.0
    %797 = vmatpush1.msra.mxu0 0.0
    %798 = vmatprep.subr.mxu0 0.0
    %799 = vmatpush1.msra.mxu0 0.0
    %800 = vmatprep.subr.mxu0 0.0
    %801 = vmatpush1.msra.mxu0 0.0
    %802 = vmatprep.subr.mxu0 0.0
    %803 = vmatpush1.msra.mxu0 0.0
    %804 = vmatprep.subr.mxu0 0.0
    %805 = vmatpush1.msra.mxu0 0.0
    %806 = vmatprep.subr.mxu0 0.0
    %807 = vmatpush1.msra.mxu0 0.0
    %808 = vmatprep.subr.mxu0 0.0
    %809 = vmatpush1.msra.mxu0 0.0
    %810 = vmatprep.subr.mxu0 0.0
    %811 = vmatpush1.msra.mxu0 0.0
    %812 = vmatprep.subr.mxu0 0.0
    %813 = vmatpush1.msra.mxu0 0.0
    %814 = vmatprep.subr.mxu0 0.0
    %815 = vmatpush1.msra.mxu0 0.0
    %816 = vmatprep.subr.mxu0 0.0
    %817 = vmatpush1.msra.mxu0 0.0
    %818 = vmatprep.subr.mxu0 0.0
    %819 = vmatpush1.msra.mxu0 0.0
    %820 = vmatprep.subr.mxu0 0.0
    %821 = vmatpush1.msra.mxu0 %v158
    %822 = vmatprep.subr.mxu0 0.0
    %823 = vmatpush1.msra.mxu0 %v157
    %824 = vmatprep.subr.mxu0 0.0
    %825 = vmatpush1.msra.mxu0 %v156
    %826 = vmatprep.subr.mxu0 0.0
    %827 = vmatpush1.msra.mxu0 %v155
    %828 = vmatprep.subr.mxu0 0.0
    %829 = vmatpush2.msra.mxu0 0.0
    %830 = vmatprep.subr.mxu0 0.0
    %831 = vmatpush2.msra.mxu0 0.0
    %832 = vmatprep.subr.mxu0 0.0
    %833 = vmatpush2.msra.mxu0 0.0
    %834 = vmatprep.subr.mxu0 0.0
    %835 = vmatpush2.msra.mxu0 0.0
    %836 = vmatprep.subr.mxu0 0.0
    %837 = vmatpush2.msra.mxu0 0.0
    %838 = vmatprep.subr.mxu0 0.0
    %839 = vmatpush2.msra.mxu0 0.0
    %840 = vmatprep.subr.mxu0 0.0
    %841 = vmatpush2.msra.mxu0 0.0
    %842 = vmatprep.subr.mxu0 0.0
    %843 = vmatpush2.msra.mxu0 0.0
    %844 = vmatprep.subr.mxu0 0.0
    %845 = vmatpush2.msra.mxu0 0.0
    %846 = vmatprep.subr.mxu0 0.0
    %847 = vmatpush2.msra.mxu0 0.0
    %848 = vmatprep.subr.mxu0 0.0
    %849 = vmatpush2.msra.mxu0 0.0
    %850 = vmatprep.subr.mxu0 0.0
    %851 = vmatpush2.msra.mxu0 0.0
    %852 = vmatprep.subr.mxu0 0.0
    %853 = vmatpush2.msra.mxu0 0.0
    %854 = vmatprep.subr.mxu0 0.0
    %855 = vmatpush2.msra.mxu0 0.0
    %856 = vmatprep.subr.mxu0 0.0
    %857 = vmatpush2.msra.mxu0 0.0
    %858 = vmatprep.subr.mxu0 0.0
    %859 = vmatpush2.msra.mxu0 0.0
    %860 = vmatprep.mubr.f32.mxu0 0.0
    %861 = vmatmul.mubr.f32.gmra.mxu0 %v794
    %v862 = vpop.f32.mrf.mxu0
    %v863 = vadd.f32 0.0, %v862
    %v864 = vpop.f32.mrf.mxu0
    %865 = vdwg.mxu0
    %v866 = vadd.f32 %v149, %v863
    %v867 = vxor.u32 %v866, 2147483648
    %v868 = vmul.f32 %v867, 1.442695
    %v869 = vpow.pop %v868
    %v870 = vadd.f32 %v869, 1.0
    %v871 = vrcp.pop %v870
    %v872 = vmul.f32 1.0, %v871
    %v873 = vtanh.pop %v866
    %v874 = vmul.f32 %v872, %v790
    %876 = vrot.lane.b32.xlu0 %v873, 64
    %v877 = vpop.permute.xlu0 %876
    %v879 = vmul.f32 %v872, %v877
    %881 = vrot.lane.b32.xlu0 %v879, 32
    %v882 = vpop.permute.xlu0 %881
    %v884 = vadd.f32 %v874, %v882
    %v885 = vtanh.pop %v884
    %887 = vrot.lane.b32.xlu0 %v885, 64
    %v888 = vpop.permute.xlu0 %887
    %v890 = vmul.f32 %v872, %v888
    %v891 = vsel %vm169, %v890, %v789
    %v892 = vsel %vm169, %v884, %v790
    %894 = vrot.lane.b32.xlu0 %v891, 32
    %v895 = vpop.permute.xlu0 %894
    %v896 = vsel %vm173, %v895, 0
    %898 = vmatprep.subr.mxu0 0.0
    %899 = vmatpush1.msra.mxu0 0.0
    %900 = vmatprep.subr.mxu0 0.0
    %901 = vmatpush1.msra.mxu0 0.0
    %902 = vmatprep.subr.mxu0 0.0
    %903 = vmatpush1.msra.mxu0 0.0
    %904 = vmatprep.subr.mxu0 0.0
    %905 = vmatpush1.msra.mxu0 0.0
    %906 = vmatprep.subr.mxu0 0.0
    %907 = vmatpush1.msra.mxu0 0.0
    %908 = vmatprep.subr.mxu0 0.0
    %909 = vmatpush1.msra.mxu0 0.0
    %910 = vmatprep.subr.mxu0 0.0
    %911 = vmatpush1.msra.mxu0 0.0
    %912 = vmatprep.subr.mxu0 0.0
    %913 = vmatpush1.msra.mxu0 0.0
    %914 = vmatprep.subr.mxu0 0.0
    %915 = vmatpush1.msra.mxu0 0.0
    %916 = vmatprep.subr.mxu0 0.0
    %917 = vmatpush1.msra.mxu0 0.0
    %918 = vmatprep.subr.mxu0 0.0
    %919 = vmatpush1.msra.mxu0 0.0
    %920 = vmatprep.subr.mxu0 0.0
    %921 = vmatpush1.msra.mxu0 0.0
    %922 = vmatprep.subr.mxu0 0.0
    %923 = vmatpush1.msra.mxu0 %v158
    %924 = vmatprep.subr.mxu0 0.0
    %925 = vmatpush1.msra.mxu0 %v157
    %926 = vmatprep.subr.mxu0 0.0
    %927 = vmatpush1.msra.mxu0 %v156
    %928 = vmatprep.subr.mxu0 0.0
    %929 = vmatpush1.msra.mxu0 %v155
    %930 = vmatprep.subr.mxu0 0.0
    %931 = vmatpush2.msra.mxu0 0.0
    %932 = vmatprep.subr.mxu0 0.0
    %933 = vmatpush2.msra.mxu0 0.0
    %934 = vmatprep.subr.mxu0 0.0
    %935 = vmatpush2.msra.mxu0 0.0
    %936 = vmatprep.subr.mxu0 0.0
    %937 = vmatpush2.msra.mxu0 0.0
    %938 = vmatprep.subr.mxu0 0.0
    %939 = vmatpush2.msra.mxu0 0.0
    %940 = vmatprep.subr.mxu0 0.0
    %941 = vmatpush2.msra.mxu0 0.0
    %942 = vmatprep.subr.mxu0 0.0
    %943 = vmatpush2.msra.mxu0 0.0
    %944 = vmatprep.subr.mxu0 0.0
    %945 = vmatpush2.msra.mxu0 0.0
    %946 = vmatprep.subr.mxu0 0.0
    %947 = vmatpush2.msra.mxu0 0.0
    %948 = vmatprep.subr.mxu0 0.0
    %949 = vmatpush2.msra.mxu0 0.0
    %950 = vmatprep.subr.mxu0 0.0
    %951 = vmatpush2.msra.mxu0 0.0
    %952 = vmatprep.subr.mxu0 0.0
    %953 = vmatpush2.msra.mxu0 0.0
    %954 = vmatprep.subr.mxu0 0.0
    %955 = vmatpush2.msra.mxu0 0.0
    %956 = vmatprep.subr.mxu0 0.0
    %957 = vmatpush2.msra.mxu0 0.0
    %958 = vmatprep.subr.mxu0 0.0
    %959 = vmatpush2.msra.mxu0 0.0
    %960 = vmatprep.subr.mxu0 0.0
    %961 = vmatpush2.msra.mxu0 0.0
    %962 = vmatprep.mubr.f32.mxu0 0.0
    %963 = vmatmul.mubr.f32.gmra.mxu0 %v896
    %v964 = vpop.f32.mrf.mxu0
    %v965 = vadd.f32 0.0, %v964
    %v966 = vpop.f32.mrf.mxu0
    %967 = vdwg.mxu0
    %v968 = vadd.f32 %v152, %v965
    %v969 = vxor.u32 %v968, 2147483648
    %v970 = vmul.f32 %v969, 1.442695
    %v971 = vpow.pop %v970
    %v972 = vadd.f32 %v971, 1.0
    %v973 = vrcp.pop %v972
    %v974 = vmul.f32 1.0, %v973
    %v975 = vtanh.pop %v968
    %v976 = vmul.f32 %v974, %v892
    %978 = vrot.lane.b32.xlu0 %v975, 64
    %v979 = vpop.permute.xlu0 %978
    %v981 = vmul.f32 %v974, %v979
    %983 = vrot.lane.b32.xlu0 %v981, 32
    %v984 = vpop.permute.xlu0 %983
    %v986 = vadd.f32 %v976, %v984
    %v987 = vtanh.pop %v986
    %989 = vrot.lane.b32.xlu0 %v987, 64
    %v990 = vpop.permute.xlu0 %989
    %v992 = vmul.f32 %v974, %v990
    %v993 = vsel %vm170, %v992, %v891
    %v994 = vld [vmem:[%s7] sm:$0xff]
    %v995 = vld [vmem:[%s7 + $0x8] sm:$0xff]
    %v996 = vld [vmem:[%s7 + $0x10] sm:$0xff]
    %v997 = vld [vmem:[%s7 + $0x18] sm:$0xff]
    %v998 = vld [vmem:[%s8] sm:$0x1]
    %v1000 = vlaneseq
    %v1001 = vshrl.u32 %v1000, 7
    %v1002 = vsub.s32 0, %v1001
    %v1003 = vrot.slane %v998, %v1002
    %1006 = vrot.lane.b32.xlu0 %v993, 32
    %v1007 = vpop.permute.xlu0 %1006
    %v1008 = vsel %vm173, %v1007, 0
    %1010 = vmatprep.subr.mxu0 0.0
    %1011 = vmatpush1.msra.mxu0 0.0
    %1012 = vmatprep.subr.mxu0 0.0
    %1013 = vmatpush1.msra.mxu0 0.0
    %1014 = vmatprep.subr.mxu0 0.0
    %1015 = vmatpush1.msra.mxu0 0.0
    %1016 = vmatprep.subr.mxu0 0.0
    %1017 = vmatpush1.msra.mxu0 0.0
    %1018 = vmatprep.subr.mxu0 0.0
    %1019 = vmatpush1.msra.mxu0 0.0
    %1020 = vmatprep.subr.mxu0 0.0
    %1021 = vmatpush1.msra.mxu0 0.0
    %1022 = vmatprep.subr.mxu0 0.0
    %1023 = vmatpush1.msra.mxu0 0.0
    %1024 = vmatprep.subr.mxu0 0.0
    %1025 = vmatpush1.msra.mxu0 0.0
    %1026 = vmatprep.subr.mxu0 0.0
    %1027 = vmatpush1.msra.mxu0 0.0
    %1028 = vmatprep.subr.mxu0 0.0
    %1029 = vmatpush1.msra.mxu0 0.0
    %1030 = vmatprep.subr.mxu0 0.0
    %1031 = vmatpush1.msra.mxu0 0.0
    %1032 = vmatprep.subr.mxu0 0.0
    %1033 = vmatpush1.msra.mxu0 0.0
    %1034 = vmatprep.subr.mxu0 0.0
    %1035 = vmatpush1.msra.mxu0 %v997
    %1036 = vmatprep.subr.mxu0 0.0
    %1037 = vmatpush1.msra.mxu0 %v996
    %1038 = vmatprep.subr.mxu0 0.0
    %1039 = vmatpush1.msra.mxu0 %v995
    %1040 = vmatprep.subr.mxu0 0.0
    %1041 = vmatpush1.msra.mxu0 %v994
    %1042 = vmatprep.subr.mxu0 0.0
    %1043 = vmatpush2.msra.mxu0 0.0
    %1044 = vmatprep.subr.mxu0 0.0
    %1045 = vmatpush2.msra.mxu0 0.0
    %1046 = vmatprep.subr.mxu0 0.0
    %1047 = vmatpush2.msra.mxu0 0.0
    %1048 = vmatprep.subr.mxu0 0.0
    %1049 = vmatpush2.msra.mxu0 0.0
    %1050 = vmatprep.subr.mxu0 0.0
    %1051 = vmatpush2.msra.mxu0 0.0
    %1052 = vmatprep.subr.mxu0 0.0
    %1053 = vmatpush2.msra.mxu0 0.0
    %1054 = vmatprep.subr.mxu0 0.0
    %1055 = vmatpush2.msra.mxu0 0.0
    %1056 = vmatprep.subr.mxu0 0.0
    %1057 = vmatpush2.msra.mxu0 0.0
    %1058 = vmatprep.subr.mxu0 0.0
    %1059 = vmatpush2.msra.mxu0 0.0
    %1060 = vmatprep.subr.mxu0 0.0
    %1061 = vmatpush2.msra.mxu0 0.0
    %1062 = vmatprep.subr.mxu0 0.0
    %1063 = vmatpush2.msra.mxu0 0.0
    %1064 = vmatprep.subr.mxu0 0.0
    %1065 = vmatpush2.msra.mxu0 0.0
    %1066 = vmatprep.subr.mxu0 0.0
    %1067 = vmatpush2.msra.mxu0 0.0
    %1068 = vmatprep.subr.mxu0 0.0
    %1069 = vmatpush2.msra.mxu0 0.0
    %1070 = vmatprep.subr.mxu0 0.0
    %1071 = vmatpush2.msra.mxu0 0.0
    %1072 = vmatprep.subr.mxu0 0.0
    %1073 = vmatpush2.msra.mxu0 0.0
    %1074 = vmatprep.mubr.f32.mxu0 0.0
    %1075 = vmatmul.mubr.f32.gmra.mxu0 %v1008
    %v1076 = vpop.f32.mrf.mxu0
    %v1077 = vadd.f32 %v1003, %v1076
    %v1078 = vpop.f32.mrf.mxu0
    %1079 = vdwg.mxu0
    %vm1080 = vcmask 64512
    %v1081 = vsel %vm1080, %v1077, -inf
    %1082 = vmax.xlane.f32.xlu0 %v1081
    %v1083 = vpop.xlane.xlu0 %1082
    %v1084 = vsub.f32 %v1077, %v1083
    %v1085 = vmul.f32 %v1084, 1.442695
    %v1086 = vpow.pop %v1085
    %v1087 = vsel %vm1080, %v1086, 0.0
    %1088 = vadd.xlane.f32.xlu0 %v1087
    %v1089 = vpop.xlane.xlu0 %1088
    %v1090 = vlog2.pop %v1089
    %v1091 = vmul.f32 %v1090, 0.6931472
    %v1092 = vsub.f32 %v1084, %v1091
    %1093 = vst.msk [vmem:[#allocation2] sm:$0xff] %vm1080, %v1092
    // Predicated region
    $region38: #{tpu_custom_call.1} parent=1 // pred_check
      _
    $region39: #{tpu_custom_call.1} parent=1 // pred_check_branch
      %1095 = sbr.rel (0) target = $region41
    $region40: #{tpu_custom_call.1} parent=1 // pred_region
      %s1097 = ssub.s32 128, 128
      %1098 = vsyncadd [#allocation3], %s1097
      %s1100 = sshll.u32 [#allocation2], 4
      %s1101 = int_to_ptr.vmem [resolvable:$true] %s1100
      %1103 = dma.vmem_to_hbm [thread:$0]  %s1101, 128, %s9, [#allocation3]
    $region41: #{tpu_custom_call.1} parent=1 // pred_fallthru
      _
    // Predicated region
    $region42: #{tpu_custom_call.1} parent=1 // pred_check
      _
    $region43: #{tpu_custom_call.1} parent=1 // pred_check_branch
      %1105 = sbr.rel (0) target = $region45
    $region44: #{tpu_custom_call.1} parent=1 // pred_region
      %1106 = dma.done [#allocation3], 128
    $region45: #{tpu_custom_call.1} parent=1 // pred_fallthru
      _
    %1107 = vsyncpa [#allocation3], 1

</llo_original>
